<compile_context>
chip_gen: v6e
topology: v6e:2x2x1
jax: 0.10.0
libtpu: 0.0.40
codegen_flags: <defaults>
</compile_context>

<pallas_src>
import functools

import jax
import jax.numpy as jnp
from jax.experimental import pallas as pl
from jax.experimental.pallas import tpu as pltpu


_OUT_SUBLANES = 8     # output tile is one full (8, 128) f32 vreg tile per block
_OUT_LANES = 128


def _label_smoothing_kernel(pred_ref, tgt_logit_ref, out_ref, *,
                            eps: float, total_n: int, block_n: int):
    i = pl.program_id(0)

    x = pred_ref[...].astype(jnp.float32)               # (bn, C) — the only
    bn, n_class = x.shape                                 # full-width f32 pass

    # Numerically stable log-softmax reductions: lane reductions go to the XLU,
    # exp to the EUP; the only full-width VPU op is the fused (x - m) subtract.
    m = jnp.max(x, axis=1, keepdims=True)                 # (bn, 1)
    s_exp = jnp.sum(jnp.exp(x - m), axis=1, keepdims=True)
    lse = m + jnp.log(s_exp)                              # logsumexp per row
    sum_x = jnp.sum(x, axis=1, keepdims=True)

    # sum_j log_prb[r, j] = sum_j x[r, j] - C * lse[r]
    # log_prb[r, target[r]] = x[r, target[r]] - lse[r]   (x[r, target[r]] was
    # gathered outside the kernel and arrives as a (bn, 1) input)
    a = jnp.float32(eps / (n_class - 1))
    b = jnp.float32((1.0 - eps) - eps / (n_class - 1))
    sum_logprb = sum_x - jnp.float32(n_class) * lse
    logprb_tgt = tgt_logit_ref[...] - lse
    row_loss = -(a * sum_logprb + b * logprb_tgt)         # (bn, 1)

    # Zero padded rows of a ragged last block.  Must stay a select (jnp.where),
    # NOT a multiply-by-mask: padded rows read stale VMEM and may hold NaN/Inf.
    row_idx = i * block_n + jax.lax.broadcasted_iota(jnp.int32, (bn, 1), 0)
    masked = jnp.where(row_idx < total_n, row_loss, jnp.float32(0.0))

    # One f32 partial per grid step, written as a full lane-dense tile so the
    # store is a single unmasked vst (no (bn,1) masked partial-store column).
    partial = jnp.sum(masked)
    out_ref[...] = jnp.full((_OUT_SUBLANES, _OUT_LANES), partial,
                            dtype=jnp.float32)


def _round_up(v: int, m: int) -> int:
    return ((v + m - 1) // m) * m


def _vmem_capacity_bytes() -> int:
    try:
        info = pltpu.get_tpu_info()
        cap = getattr(info, "vmem_capacity_bytes", None)
        if cap:
            return int(cap)
    except Exception:
        pass
    return 64 * 1024 * 1024          # conservative default (v7x-sized)


def _pick_block_n(n: int, c: int, itemsize: int) -> int:
    """Row tile sized from the f32 working footprint, capped for multi-TC."""
    pack = 8 * max(1, 4 // max(1, itemsize))   # sublane packing (8 f32 / 16 bf16)
    # Per-row working bytes: double-buffered input block + ~3 live (bn, C) f32
    # temporaries (x_f32, exp(x-m), select output) — NOT the input itemsize.
    tile_budget = 4 * 1024 * 1024              # ~2-4 MiB knee (≈85% HBM roofline)
    bytes_per_row = c * (2 * itemsize + 3 * 4)
    rows = tile_budget // max(1, bytes_per_row)
    rows = max(pack, (rows // pack) * pack)
    rows = min(rows, _round_up(n, pack))       # never bigger than (padded) batch
    # Guarantee >= 2 (ideally >= 4) grid blocks so the "parallel" axis can be
    # sharded across both TensorCores on v7x (no-op for 1-TC v5e/v6e).
    if n >= 4 * pack:
        min_blocks = 4
    elif n >= 2 * pack:
        min_blocks = 2
    else:
        min_blocks = 1
    if min_blocks > 1:
        rows = min(rows, max(pack, _round_up(-(-n // min_blocks), pack)))
    return rows


def label_smoothing_loss(pred: jax.Array, target: jax.Array,
                         smoothing_ratio: float, *, block_n: int | None = None
                         ) -> jax.Array:
    """pred: (N, C) float (f32/bf16/...); target: (N,) int. Returns scalar f32 loss."""
    n, c = pred.shape
    itemsize = pred.dtype.itemsize
    pack = 8 * max(1, 4 // max(1, itemsize))

    bn = (_pick_block_n(n, c, itemsize) if block_n is None
          else max(pack, _round_up(int(block_n), pack)))
    num_blocks = pl.cdiv(n, bn)

    # Pre-gather the target-class logit (tiny N-element XLA gather) so the
    # kernel never builds the full-width iota/compare/select for the target
    # term.  NOTE: JAX clamps out-of-range gather indices instead of raising
    # (PyTorch's scatter would error loudly); callers must pass 0 <= target < C.
    tgt_logit = jnp.take_along_axis(
        pred, target.astype(jnp.int32).reshape(n, 1), axis=1).astype(jnp.float32)

    kernel = functools.partial(_label_smoothing_kernel,
                               eps=float(smoothing_ratio), total_n=n, block_n=bn)

    vmem_cap = _vmem_capacity_bytes()
    vmem_limit = int(min(0.7 * vmem_cap, 64 * 1024 * 1024))

    # Advisory cost hint (reads every logit once, ~exp per logit).
    cost = pl.CostEstimate(
        flops=6 * n * c,
        transcendentals=n * c,
        bytes_accessed=(n * c * itemsize + n * 4
                        + num_blocks * _OUT_SUBLANES * _OUT_LANES * 4),
    )

    out = pl.pallas_call(
        kernel,
        out_shape=jax.ShapeDtypeStruct((num_blocks * _OUT_SUBLANES, _OUT_LANES),
                                       jnp.float32),
        grid_spec=pltpu.PrefetchScalarGridSpec(
            num_scalar_prefetch=0,
            grid=(num_blocks,),
            in_specs=[
                pl.BlockSpec((bn, c), lambda i: (i, 0)),   # logits row tile
                pl.BlockSpec((bn, 1), lambda i: (i, 0)),   # gathered target logit
            ],
            out_specs=pl.BlockSpec((_OUT_SUBLANES, _OUT_LANES), lambda i: (i, 0)),
        ),
        compiler_params=pltpu.CompilerParams(
            dimension_semantics=("parallel",),             # rows are independent
            vmem_limit_bytes=vmem_limit),
        cost_estimate=cost,
    )(pred, tgt_logit)

    # Each block's tile holds its partial sum broadcast; take one element per
    # block and finish the mean in plain JAX (num_blocks elements only).
    per_block = out[::_OUT_SUBLANES, 0]
    return jnp.sum(per_block) / jnp.float32(n)


def _reference(pred, target, eps):
    n, c = pred.shape
    one_hot = jax.nn.one_hot(target, c, dtype=jnp.float32)
    one_hot = one_hot * (1.0 - eps) + (1.0 - one_hot) * eps / (c - 1)
    log_prb = jax.nn.log_softmax(pred.astype(jnp.float32), axis=1)
    return -(one_hot * log_prb).sum(axis=1).mean()


if __name__ == "__main__":
    smoothing_ratio = 0.1              # cfg.LOSSES.LABELSMOOTHING (deterministic)
    key = jax.random.PRNGKey(0)

    # --- test 1: small f32, auto block_n (2 blocks -> exercises multi-block) --
    N, C = 16, 32
    k1, k2, key = jax.random.split(key, 3)
    pred = jax.random.normal(k1, (N, C), dtype=jnp.float32)
    target = jax.random.randint(k2, (N,), 0, C, dtype=jnp.int32)
    loss = jax.block_until_ready(label_smoothing_loss(pred, target, smoothing_ratio))
    ref = _reference(pred, target, smoothing_ratio)
    assert jnp.allclose(loss, ref, rtol=1e-4, atol=1e-4), (loss, ref)

    # --- test 2: ragged last block (N not a multiple of block_n) -------------
    N2, C2 = 20, 32
    k3, k4, key = jax.random.split(key, 3)
    pred2 = jax.random.normal(k3, (N2, C2), dtype=jnp.float32)
    target2 = jax.random.randint(k4, (N2,), 0, C2, dtype=jnp.int32)
    loss2 = jax.block_until_ready(
        label_smoothing_loss(pred2, target2, smoothing_ratio, block_n=8))
    ref2 = _reference(pred2, target2, smoothing_ratio)
    assert jnp.allclose(loss2, ref2, rtol=1e-4, atol=1e-4), (loss2, ref2)

    # --- test 3: bf16 logits (half HBM bytes; in-kernel math stays f32) ------
    N3, C3 = 64, 128
    k5, k6, key = jax.random.split(key, 3)
    pred3 = jax.random.normal(k5, (N3, C3), dtype=jnp.float32).astype(jnp.bfloat16)
    target3 = jax.random.randint(k6, (N3,), 0, C3, dtype=jnp.int32)
    loss3 = jax.block_until_ready(label_smoothing_loss(pred3, target3, smoothing_ratio))
    ref3 = _reference(pred3.astype(jnp.float32), target3, smoothing_ratio)
    assert jnp.allclose(loss3, ref3, rtol=1e-4, atol=1e-4), (loss3, ref3)

    print("KERNEL_OK")
</pallas_src>

<mosaic_0001>
module attributes {stable_mosaic.version = 11 : i64} {
  func.func @_label_smoothing_kernel(%arg0: i32, %arg1: memref<8x32xf32, #tpu.memory_space<vmem>>, %arg2: memref<8x1xf32, #tpu.memory_space<vmem>>, %arg3: memref<8x128xf32, #tpu.memory_space<vmem>>) attributes {dimension_semantics = [#tpu.dimension_semantics<parallel>], iteration_bounds = array<i64: 2>, scalar_prefetch = 0 : i64, scratch_operands = 0 : i64, tpu.core_type = #tpu.core_type<tc>, window_params = [{transform_indices = @transform_0, window_bounds = array<i64: 8, 32>}, {transform_indices = @transform_1, window_bounds = array<i64: 8, 1>}, {transform_indices = @transform_2, window_bounds = array<i64: 8, 128>}]} {
    %c0 = arith.constant 0 : index
    %c0_0 = arith.constant 0 : index
    %0 = vector.load %arg1[%c0, %c0_0] : memref<8x32xf32, #tpu.memory_space<vmem>>, vector<8x32xf32>
    %cst = arith.constant dense<0xFF800000> : vector<8xf32>
    %1 = vector.multi_reduction <maximumf>, %0, %cst [1] : vector<8x32xf32> to vector<8xf32>
    %2 = vector.shape_cast %1 : vector<8xf32> to vector<8x1xf32>
    %3 = vector.broadcast %2 : vector<8x1xf32> to vector<8x32xf32>
    %4 = arith.subf %0, %3 : vector<8x32xf32>
    %5 = math.exp %4 : vector<8x32xf32>
    %cst_1 = arith.constant dense<0.000000e+00> : vector<8xf32>
    %6 = vector.multi_reduction <add>, %5, %cst_1 [1] : vector<8x32xf32> to vector<8xf32>
    %7 = vector.shape_cast %6 : vector<8xf32> to vector<8x1xf32>
    %8 = math.log %7 : vector<8x1xf32>
    %9 = arith.addf %2, %8 : vector<8x1xf32>
    %cst_2 = arith.constant dense<0.000000e+00> : vector<8xf32>
    %10 = vector.multi_reduction <add>, %0, %cst_2 [1] : vector<8x32xf32> to vector<8xf32>
    %11 = vector.shape_cast %10 : vector<8xf32> to vector<8x1xf32>
    %cst_3 = arith.constant 3.200000e+01 : f32
    %12 = vector.broadcast %cst_3 : f32 to vector<8x1xf32>
    %13 = arith.mulf %12, %9 : vector<8x1xf32>
    %14 = arith.subf %11, %13 : vector<8x1xf32>
    %c0_4 = arith.constant 0 : index
    %c0_5 = arith.constant 0 : index
    %15 = vector.load %arg2[%c0_4, %c0_5] : memref<8x1xf32, #tpu.memory_space<vmem>>, vector<8x1xf32>
    %16 = arith.subf %15, %9 : vector<8x1xf32>
    %cst_6 = arith.constant 0.0032258064 : f32
    %17 = vector.broadcast %cst_6 : f32 to vector<8x1xf32>
    %18 = arith.mulf %17, %14 : vector<8x1xf32>
    %cst_7 = arith.constant 0.896774172 : f32
    %19 = vector.broadcast %cst_7 : f32 to vector<8x1xf32>
    %20 = arith.mulf %19, %16 : vector<8x1xf32>
    %21 = arith.addf %18, %20 : vector<8x1xf32>
    %cst_8 = arith.constant 0.000000e+00 : f32
    %22 = vector.broadcast %cst_8 : f32 to vector<8x1xf32>
    %23 = arith.subf %22, %21 : vector<8x1xf32>
    %c8_i32 = arith.constant 8 : i32
    %24 = arith.muli %arg0, %c8_i32 : i32
    %25 = tpu.iota {dimensions = array<i32: 0>} : vector<8x1xi32>
    %26 = vector.broadcast %24 : i32 to vector<8x1xi32>
    %27 = arith.addi %26, %25 : vector<8x1xi32>
    %c16_i32 = arith.constant 16 : i32
    %28 = vector.broadcast %c16_i32 : i32 to vector<8x1xi32>
    %29 = arith.cmpi slt, %27, %28 : vector<8x1xi32>
    %cst_9 = arith.constant 0.000000e+00 : f32
    %30 = vector.broadcast %cst_9 : f32 to vector<8x1xf32>
    %31 = arith.select %29, %23, %30 : vector<8x1xi1>, vector<8x1xf32>
    %32 = vector.shape_cast %31 : vector<8x1xf32> to vector<1x8x1xf32>
    %cst_10 = arith.constant dense<0.000000e+00> : vector<1xf32>
    %33 = vector.multi_reduction <add>, %32, %cst_10 [1, 2] : vector<1x8x1xf32> to vector<1xf32>
    %34 = vector.shape_cast %33 : vector<1xf32> to vector<1x1x1xf32>
    %35 = vector.extract %34[0, 0, 0] : f32 from vector<1x1x1xf32>
    %36 = vector.broadcast %35 : f32 to vector<8x128xf32>
    %c0_11 = arith.constant 0 : index
    %c0_12 = arith.constant 0 : index
    %37 = vector.load %arg3[%c0_11, %c0_12] : memref<8x128xf32, #tpu.memory_space<vmem>>, vector<8x128xf32>
    tpu.vector_store %arg3[%c0_11, %c0_12], %36 {strides = array<i32>} : memref<8x128xf32, #tpu.memory_space<vmem>>, vector<8x128xf32>,
    return
  }
  func.func @transform_0(%arg0: i32) -> (i32, i32) {
    %c0_i32 = arith.constant 0 : i32
    %c0_i32_0 = arith.constant 0 : i32
    return %arg0, %c0_i32 : i32, i32
  }
  func.func @transform_1(%arg0: i32) -> (i32, i32) {
    %c0_i32 = arith.constant 0 : i32
    %c0_i32_0 = arith.constant 0 : i32
    return %arg0, %c0_i32 : i32, i32
  }
  func.func @transform_2(%arg0: i32) -> (i32, i32) {
    %c0_i32 = arith.constant 0 : i32
    %c0_i32_0 = arith.constant 0 : i32
    return %arg0, %c0_i32 : i32, i32
  }
}

</mosaic_0001>

<llo_original>
// kernel: tpu_custom_call.1
$region0: #{tpu_custom_call.1}
  #allocation0 [shape = 'u32[]', space=smem, size = 0x4, offset = 0x4, fixed_abs, tag = 'smem constant byte address 0x4 - core index']
  #allocation1 [shape = 'u32[144,128]{1,0:T(1,128)}', space=vmem, size = 0x12000, scoped, tag = 'internal scratch']
  %s0 = inlined_call_operand.vmem [shape: f32[16,32], index: 0, kind: input, shape index: {}]
  %s1 = inlined_call_operand.vmem [shape: f32[16,1], index: 1, kind: input, shape index: {}]
  %s2 = inlined_call_operand.hbm [shape: f32[16,128], index: 2, kind: output, shape index: {}]
  %s3 = sld [smem:[#allocation0]]
  $region41: #{tpu_custom_call.1} parent=0
    _
  %s5 = ssub.s32 1, %s3
  %s6 = scalar_select 0, %s5, %s3
  $region1: #{tpu_custom_call.1} parent=0
    #allocation2 [shape = 'u8[8192]{0}', space=vmem, size = 0x2000, scoped, tag = 'output window, operand 0']
    #allocation3 [shape = 's32[2]{0}', space=sflag, size = 0x8, scoped, tag = 'scoped memory for tpu_custom_call.1']
    %7 = vsyncpa [#allocation3], 0
    %s8 = scalar_lea.sflag [#allocation3], 1
    %9 = vsyncpa %s8, 0
    loop: start=0, step=1, limit=4
    $region2: #{tpu_custom_call.1} parent=1 // loop_pre_header
      _
    $region3: #{tpu_custom_call.1} parent=1 // loop_header
      %s11 = sphi 0, %s15
      %p12 = scmp.ge.s32.totalorder %s11, 4
      %s21 = sphi 0, %s23
      %s24 = sphi 0, %s21
      %s25 = sphi 0, %s24
      %s41 = sphi 0, %s25
      %s47 = sphi 0, %s49
      %s50 = sphi 0, %s47
      %s51 = sphi 0, %s50
      %s67 = sphi 0, %s51
      %s73 = sphi 0, %s75
      %s76 = sphi 0, %s73
      %s77 = sphi 0, %s76
      %s93 = sphi 0, %s77
    $region4: #{tpu_custom_call.1} parent=1 // loop_header_branch
      %14 = sbr.rel (%p12) target = $region8
    $region5: #{tpu_custom_call.1} parent=1 // loop_body
      %s16 = ssub.s32 %s11, 1
      %s17 = ssub.s32 %s11, 2
      %s18 = sadd.s32 %s11, 1
      %s19 = ssub.s32 %s11, %s18
      %p20 = scmp.eq.s32.totalorder %s19, 0
      %s22 = sadd.s32 %s21, 1
      %s23 = scalar_select %p20, %s21, %s22
      %p26 = pneg %p20
      %p27 = scmp.eq.s32.totalorder %s11, 1
      %p28 = por %p26, %p27
      %p29 = scmp.ne.s32.totalorder %s21, %s24
      %p30 = scmp.eq.s32.totalorder %s11, 0
      %p31 = por %p29, %p30
      %p32 = scmp.ne.s32.totalorder %s21, %s24
      %p33 = scmp.eq.s32.totalorder %s16, 1
      %p34 = por %p32, %p33
      %p35 = scmp.ne.s32.totalorder %s24, %s25
      %p36 = scmp.eq.s32.totalorder %s16, 0
      %p37 = por %p35, %p36
      %p38 = scmp.ne.s32.totalorder %s24, %s25
      %p39 = scmp.eq.s32.totalorder %s17, 1
      %p40 = por %p38, %p39
      %p42 = scmp.ne.s32.totalorder %s25, %s41
      %p43 = scmp.eq.s32.totalorder %s17, 0
      %p44 = por %p42, %p43
      %s45 = ssub.s32 %s11, %s18
      %p46 = scmp.eq.s32.totalorder %s45, 0
      %s48 = sadd.s32 %s47, 1
      %s49 = scalar_select %p46, %s47, %s48
      %p52 = pneg %p46
      %p53 = scmp.eq.s32.totalorder %s11, 1
      %p54 = por %p52, %p53
      %p55 = scmp.ne.s32.totalorder %s47, %s50
      %p56 = scmp.eq.s32.totalorder %s11, 0
      %p57 = por %p55, %p56
      %p58 = scmp.ne.s32.totalorder %s47, %s50
      %p59 = scmp.eq.s32.totalorder %s16, 1
      %p60 = por %p58, %p59
      %p61 = scmp.ne.s32.totalorder %s50, %s51
      %p62 = scmp.eq.s32.totalorder %s16, 0
      %p63 = por %p61, %p62
      %p64 = scmp.ne.s32.totalorder %s50, %s51
      %p65 = scmp.eq.s32.totalorder %s17, 1
      %p66 = por %p64, %p65
      %p68 = scmp.ne.s32.totalorder %s51, %s67
      %p69 = scmp.eq.s32.totalorder %s17, 0
      %p70 = por %p68, %p69
      %s71 = ssub.s32 %s11, %s18
      %p72 = scmp.eq.s32.totalorder %s71, 0
      %s74 = sadd.s32 %s73, 1
      %s75 = scalar_select %p72, %s73, %s74
      %p78 = pneg %p72
      %p79 = scmp.eq.s32.totalorder %s11, 1
      %p80 = por %p78, %p79
      %p81 = scmp.ne.s32.totalorder %s73, %s76
      %p82 = scmp.eq.s32.totalorder %s11, 0
      %p83 = por %p81, %p82
      %p84 = scmp.ne.s32.totalorder %s73, %s76
      %p85 = scmp.eq.s32.totalorder %s16, 1
      %p86 = por %p84, %p85
      %p87 = scmp.ne.s32.totalorder %s76, %s77
      %p88 = scmp.eq.s32.totalorder %s16, 0
      %p89 = por %p87, %p88
      %p90 = scmp.ne.s32.totalorder %s76, %s77
      %p91 = scmp.eq.s32.totalorder %s17, 1
      %p92 = por %p90, %p91
      %p94 = scmp.ne.s32.totalorder %s77, %s93
      %p95 = scmp.eq.s32.totalorder %s17, 0
      %p96 = por %p94, %p95
      %p97 = scmp.le.s32.totalorder 1, %s11
      %p98 = scmp.lt.s32.totalorder %s11, 3
      %p99 = pnand %p97, %p98
      %p100 = pneg %p99
      // Predicated region
      $region9: #{tpu_custom_call.1} parent=5 // pred_check
        _
      $region10: #{tpu_custom_call.1} parent=5 // pred_check_branch
        %102 = sbr.rel (%p99) target = $region12
      $region11: #{tpu_custom_call.1} parent=5 // pred_region
        %s103 = ssub.s32 %s11, 1
      $region12: #{tpu_custom_call.1} parent=5 // pred_fallthru
        _
      %p104 = scmp.lt.s32.totalorder %s11, 2
      // Predicated region
      $region13: #{tpu_custom_call.1} parent=5 // pred_check
        %p105 = pneg %p104
      $region14: #{tpu_custom_call.1} parent=5 // pred_check_branch
        %107 = sbr.rel (%p105) target = $region16
      $region15: #{tpu_custom_call.1} parent=5 // pred_region
        // Predicated region
        $region17: #{tpu_custom_call.1} parent=15 // pred_check
          %p108 = pneg %p31
        $region18: #{tpu_custom_call.1} parent=15 // pred_check_branch
          %110 = sbr.rel (%p108) target = $region20
        $region19: #{tpu_custom_call.1} parent=15 // pred_region
          %p111 = scmp.lt.s32.totalorder %s11, 1
          %s112 = scalar_select %p111, %s11, 1
          %s113 = smul.addr %s112, 8
          %s114 = scalar_lea.vmem %s0, %s113
        $region20: #{tpu_custom_call.1} parent=15 // pred_fallthru
          _
        // Predicated region
        $region21: #{tpu_custom_call.1} parent=15 // pred_check
          %p115 = pneg %p57
        $region22: #{tpu_custom_call.1} parent=15 // pred_check_branch
          %117 = sbr.rel (%p115) target = $region24
        $region23: #{tpu_custom_call.1} parent=15 // pred_region
          %p118 = scmp.lt.s32.totalorder %s11, 1
          %s119 = scalar_select %p118, %s11, 1
          %s120 = smul.addr %s119, 8
          %s121 = scalar_lea.vmem %s1, %s120
        $region24: #{tpu_custom_call.1} parent=15 // pred_fallthru
          _
      $region16: #{tpu_custom_call.1} parent=5 // pred_fallthru
        _
      %p122 = scmp.le.s32.totalorder 1, %s11
      %p123 = scmp.lt.s32.totalorder %s11, 3
      %p124 = pnand %p122, %p123
      %p125 = pneg %p124
      // Predicated region
      $region25: #{tpu_custom_call.1} parent=5 // pred_check
        _
      $region26: #{tpu_custom_call.1} parent=5 // pred_check_branch
        %127 = sbr.rel (%p124) target = $region28
      $region27: #{tpu_custom_call.1} parent=5 // pred_region
        %s128 = ssub.s32 %s11, 1
        %p129 = scmp.lt.s32.totalorder %s16, 1
        %s130 = scalar_select %p129, %s16, 1
        %s131 = smul.addr %s130, 8
        %s132 = scalar_lea.vmem %s0, %s131
        %p133 = pneg %p37
        %p134 = pneg %p34
        %p135 = scmp.lt.s32.totalorder %s16, 1
        %s136 = scalar_select %p135, %s16, 1
        %s137 = smul.addr %s136, 8
        %s138 = scalar_lea.vmem %s1, %s137
        %p139 = pneg %p63
        %p140 = pneg %p60
        %p141 = pneg %p89
        %p142 = pneg %p86
        %s143 = sand.u32 %s76, 1
        %s144 = scalar_lea.sflag [#allocation3], %s143
        %s145 = sand.u32 %s76, 1
        %s146 = smul.addr %s145, 8
        %s147 = scalar_lea.vmem [#allocation2], %s146
        %p148 = scmp.lt.s32.totalorder %s16, 1
        %s149 = scalar_select %p148, %s16, 1
        %s150 = smul.addr %s149, 8
        %s151 = scalar_lea.vmem %s0, %s150
        %p152 = scmp.lt.s32.totalorder %s16, 1
        %s153 = scalar_select %p152, %s16, 1
        %s154 = smul.addr %s153, 8
        %s155 = scalar_lea.vmem %s1, %s154
        %v156 = vld [vmem:[%s151] sm:$0xff]
        %vm157 = vcmask 261120
        %v158 = vsel %vm157, %v156, -inf
        %159 = vmax.xlane.f32.xlu0 %v158
        %v160 = vpop.xlane.xlu0 %159
        %v161 = vsub.f32 %v156, %v160
        %v162 = vmul.f32 %v161, 1.442695
        %v163 = vpow.pop %v162
        %v164 = vsel %vm157, %v163, 0.0
        %165 = vadd.xlane.f32.xlu0 %v164
        %v166 = vpop.xlane.xlu0 %165
        %v167 = vlog2.pop %v166
        %v168 = vmul.f32 %v167, 0.6931472
        %v169 = vadd.f32 %v160, %v168
        %v170 = vsel %vm157, %v156, 0.0
        %171 = vadd.xlane.f32.xlu0 %v170
        %v172 = vpop.xlane.xlu0 %171
        %v173 = vmul.f32 %v169, 32.0
        %v174 = vsub.f32 %v172, %v173
        %v175 = vld [vmem:[%s155] sm:$0xff]
        %v176 = vsub.f32 %v175, %v169
        %v177 = vmul.f32 %v174, 0.0032258064
        %v178 = vmul.f32 %v176, 0.8967742
        %v179 = vadd.f32 %v177, %v178
        %v180 = vsub.f32 0.0, %v179
        %s181 = smul.u32 %s16, 8
        %v182 = vlaneseq
        %v183 = vshrl.u32 %v182, 7
        %v184 = vstv %s181
        %v185 = vadd.s32 %v184, %v183
        %vm186 = vcmp.lt.s32.totalorder %v185, 16
        %v187 = vsel %vm186, %v180, 0.0
        %vm188 = vcmask 7168
        %v189 = vsel %vm188, %v187, 0.0
        %190 = vadd.xlane.f32.xlu0 %v189
        %v191 = vpop.xlane.xlu0 %190
        %v192 = vrot.slane %v191, 4
        %v193 = vadd.f32 %v191, %v192
        %v194 = vrot.slane %v193, 2
        %v195 = vadd.f32 %v193, %v194
        %v196 = vrot.slane %v195, 1
        %v197 = vadd.f32 %v195, %v196
        %s198 = vtos %v197
        %v199 = vstv %s198
        %200 = vst [vmem:[%s147] sm:$0xff] %v199
        %s201 = sand.u32 %s76, 1
        %s202 = scalar_lea.sflag [#allocation3], %s201
        %s203 = sand.u32 %s76, 1
        %s204 = smul.addr %s203, 8
        %s205 = scalar_lea.vmem [#allocation2], %s204
        // Predicated region
        $region29: #{tpu_custom_call.1} parent=27 // pred_check
          %p206 = pneg %p86
        $region30: #{tpu_custom_call.1} parent=27 // pred_check_branch
          %208 = sbr.rel (%p206) target = $region32
        $region31: #{tpu_custom_call.1} parent=27 // pred_region
          %s210 = ssub.s32 128, 128
          %211 = vsyncadd %s202, %s210
          %s212 = smul.addr %s16, 128
          %s213 = scalar_lea.hbm %s2, %s212
          %s215 = sshll.u32 %s205, 4
          %s216 = int_to_ptr.vmem [resolvable:$true] %s215
          %218 = dma.vmem_to_hbm [thread:$0]  %s216, 128, %s213, %s202
        $region32: #{tpu_custom_call.1} parent=27 // pred_fallthru
          _
      $region28: #{tpu_custom_call.1} parent=5 // pred_fallthru
        _
      %p219 = scmp.le.s32.totalorder 2, %s11
      // Predicated region
      $region33: #{tpu_custom_call.1} parent=5 // pred_check
        %p220 = pneg %p219
      $region34: #{tpu_custom_call.1} parent=5 // pred_check_branch
        %222 = sbr.rel (%p220) target = $region36
      $region35: #{tpu_custom_call.1} parent=5 // pred_region
        %s223 = ssub.s32 %s11, 2
        // Predicated region
        $region37: #{tpu_custom_call.1} parent=35 // pred_check
          %p224 = pneg %p92
        $region38: #{tpu_custom_call.1} parent=35 // pred_check_branch
          %226 = sbr.rel (%p224) target = $region40
        $region39: #{tpu_custom_call.1} parent=35 // pred_region
          %s227 = sand.u32 %s77, 1
          %s228 = scalar_lea.sflag [#allocation3], %s227
          %s229 = sand.u32 %s77, 1
          %s230 = smul.addr %s229, 8
          %s231 = scalar_lea.vmem [#allocation2], %s230
          %232 = dma.done %s228, 128
        $region40: #{tpu_custom_call.1} parent=35 // pred_fallthru
          _
      $region36: #{tpu_custom_call.1} parent=5 // pred_fallthru
        _
    $region6: #{tpu_custom_call.1} parent=1 // loop_footer
      %s15 = sadd.s32 1, %s11
    $region7: #{tpu_custom_call.1} parent=1 // loop_footer_branch
      %10 = sbr.rel target = $region3
    $region8: #{tpu_custom_call.1} parent=1 // loop_exit
      _
    %233 = vsyncpa [#allocation3], 1
    %s234 = scalar_lea.sflag [#allocation3], 1
    %235 = vsyncpa %s234, 1

</llo_original>
